<compile_context>
chip_gen: v5e
topology: v5e:2x2
jax: 0.10.0
libtpu: 0.0.40
codegen_flags: <defaults>
</compile_context>

<pallas_src>
import math

import jax
import jax.numpy as jnp
from jax.experimental import pallas as pl
from jax.experimental.pallas import tpu as pltpu


def _pair(v):
    return (v, v) if isinstance(v, int) else tuple(v)


def _cdiv(a, b):
    return -(-a // b)


def _same_pad_amounts(in_h, in_w, kernel_size, stride, dilation):
    """Replicates SamePad2d.forward's pad arithmetic (all static Python ints)."""
    k_w, k_h = _pair(kernel_size)
    s_w, s_h = _pair(stride)
    d_w, d_h = _pair(dilation)
    out_w = math.ceil(float(in_w) / float(s_w))
    out_h = math.ceil(float(in_h) / float(s_h))
    eff_k_w = (k_w - 1) * d_w + 1
    eff_k_h = (k_h - 1) * d_h + 1
    pad_along_w = max((out_w - 1) * s_w + eff_k_w - in_w, 0)
    pad_along_h = max((out_h - 1) * s_h + eff_k_h - in_h, 0)
    pad_left = pad_along_w // 2
    pad_top = pad_along_h // 2
    pad_right = pad_along_w - pad_left
    pad_bottom = pad_along_h - pad_top
    return pad_left, pad_right, pad_top, pad_bottom


# ----------------------------------------------------------------------------
# VMEM / tiling arithmetic
# ----------------------------------------------------------------------------

_LANE = 128


def _sublane_pack(dtype):
    """Sublane packing of the second-minor dim: 8 (32-bit), 16 (16-bit), 32 (8-bit)."""
    itemsize = jnp.dtype(dtype).itemsize
    return 8 * max(1, 4 // itemsize)


def _tiled_plane_bytes(rows, cols, dtype):
    """Actual VMEM bytes of a (rows, cols) plane after (sublane, lane) tiling."""
    pack = _sublane_pack(dtype)
    r = _cdiv(rows, pack) * pack
    c = _cdiv(cols, _LANE) * _LANE
    return r * c * jnp.dtype(dtype).itemsize


def _vmem_budgets():
    """(vmem_limit_bytes, per_step_block_target_bytes), generation-aware."""
    vmem_cap = None
    try:
        info = pltpu.get_tpu_info()
        vmem_cap = getattr(info, "vmem_capacity_bytes", None)
    except Exception:
        vmem_cap = None
    if vmem_cap is None or vmem_cap <= 0:
        # Unknown generation: assume the smallest (v7x-class, 64 MiB) VMEM.
        vmem_cap = 64 * 1024 * 1024
    if vmem_cap <= 64 * 1024 * 1024:
        # v7x-class: half the VMEM, much faster HBM -> slightly bigger blocks.
        return 44 * 1024 * 1024, 6 * 1024 * 1024
    # v5e / v6e class (128 MiB physical VMEM).
    return 64 * 1024 * 1024, 4 * 1024 * 1024


def _choose_channel_block(nc, per_channel_bytes, vmem_limit, per_step_target):
    """Pick channels-per-block and grid steps from the tiled footprint."""
    # Hard cap: double-buffered (in + out) block must fit the scoped limit,
    # with 1/8 headroom for compiler-internal scratch.
    hard_max = (vmem_limit * 7 // 8) // (2 * per_channel_bytes)
    if hard_max < 1:
        return None, None
    soft_max = max(1, per_step_target // per_channel_bytes)
    max_blk = min(hard_max, soft_max, nc)

    # Prefer several grid steps: smoother DMA overlap, less fill/drain, and
    # work for both v7x TensorCores.
    if nc >= 8:
        min_steps = 4
    elif nc >= 2:
        min_steps = 2
    else:
        min_steps = 1
    max_blk = max(1, min(max_blk, max(1, nc // min_steps)))

    c_blk = max_blk
    steps = _cdiv(nc, c_blk)

    # Small odd step counts waste one whole step on one of v7x's two cores;
    # shrink the block slightly if that yields an even step count.
    if 1 < steps <= 8 and steps % 2 == 1:
        alt = _cdiv(nc, steps + 1)
        if alt >= 1 and _cdiv(nc, alt) % 2 == 0:
            c_blk = alt
            steps = _cdiv(nc, alt)
    return c_blk, steps


# ----------------------------------------------------------------------------
# Kernel
# ----------------------------------------------------------------------------

def _make_pad_kernel(h, w, pad_left, pad_right, pad_top, pad_bottom):
    out_w = w + pad_left + pad_right

    def kernel(x_ref, o_ref):
        blk = o_ref.shape[0]
        dt = o_ref.dtype
        # Zero only the pad bands (full-width row bands, then narrow column
        # bands of the interior rows); each output element is stored once.
        if pad_top > 0:
            o_ref[:, 0:pad_top, :] = jnp.zeros((blk, pad_top, out_w), dt)
        if pad_bottom > 0:
            o_ref[:, pad_top + h:, :] = jnp.zeros((blk, pad_bottom, out_w), dt)
        if pad_left > 0:
            o_ref[:, pad_top:pad_top + h, 0:pad_left] = jnp.zeros((blk, h, pad_left), dt)
        if pad_right > 0:
            o_ref[:, pad_top:pad_top + h, pad_left + w:] = jnp.zeros((blk, h, pad_right), dt)
        # Single copy of the input block into the interior window.
        o_ref[:, pad_top:pad_top + h, pad_left:pad_left + w] = x_ref[...]

    return kernel


# ----------------------------------------------------------------------------
# Public wrapper
# ----------------------------------------------------------------------------

def same_pad_2d(x, kernel_size, stride, dilation=1):
    """TF-'SAME' zero padding of an NCHW tensor, done inside a Pallas kernel.

    x: (N, C, H, W). Returns (N, C, H + pad_h, W + pad_w), same dtype.
    """
    n, c, h, w = x.shape
    pad_left, pad_right, pad_top, pad_bottom = _same_pad_amounts(
        h, w, kernel_size, stride, dilation
    )

    # Fast path: SAME padding is frequently zero; skip the HBM round-trip.
    if pad_left == pad_right == pad_top == pad_bottom == 0:
        return x

    out_h = h + pad_top + pad_bottom
    out_w = w + pad_left + pad_right
    itemsize = jnp.dtype(x.dtype).itemsize
    xla_pad_widths = ((0, 0), (0, 0), (pad_top, pad_bottom), (pad_left, pad_right))

    # Tiny-W dispatch: rows narrower than one 128-lane vreg row degrade into
    # masked partial stores and per-row DMA bursts well below HBM roofline;
    # XLA's fused pad is the better tool for those layers.
    if out_w * itemsize < 512:
        return jnp.pad(x, xla_pad_widths)

    nc = n * c
    vmem_limit, per_step_target = _vmem_budgets()
    per_channel_bytes = (_tiled_plane_bytes(h, w, x.dtype)
                         + _tiled_plane_bytes(out_h, out_w, x.dtype))
    c_blk, steps = _choose_channel_block(nc, per_channel_bytes, vmem_limit,
                                         per_step_target)
    if c_blk is None:
        # A single (H, W) plane does not fit the double-buffered VMEM budget.
        # TODO(synk): H-tiled Pallas variant (2D grid over channel x row bands
        # with pl.when-gated pad_top/pad_bottom bands); use XLA's pad for now.
        return jnp.pad(x, xla_pad_widths)

    # Flatten N*C so channels can be batched into large blocks (free reshape).
    xf = x.reshape(nc, h, w)

    out = pl.pallas_call(
        _make_pad_kernel(h, w, pad_left, pad_right, pad_top, pad_bottom),
        out_shape=jax.ShapeDtypeStruct((nc, out_h, out_w), x.dtype),
        grid_spec=pltpu.PrefetchScalarGridSpec(
            num_scalar_prefetch=0,
            grid=(steps,),
            in_specs=[pl.BlockSpec((c_blk, h, w), lambda i: (i, 0, 0))],
            out_specs=pl.BlockSpec((c_blk, out_h, out_w), lambda i: (i, 0, 0)),
        ),
        compiler_params=pltpu.CompilerParams(
            dimension_semantics=("parallel",),
            vmem_limit_bytes=vmem_limit,
        ),
    )(xf)
    return out.reshape(n, c, out_h, out_w)


# ----------------------------------------------------------------------------
# Demo / self-check
# ----------------------------------------------------------------------------

if __name__ == "__main__":
    key = jax.random.PRNGKey(0)
    k1, k2, k3 = jax.random.split(key, 3)

    def ref_pad(x, kernel_size, stride, dilation=1):
        hh, ww = x.shape[2], x.shape[3]
        pl_, pr_, pt_, pb_ = _same_pad_amounts(hh, ww, kernel_size, stride, dilation)
        return jnp.pad(x, ((0, 0), (0, 0), (pt_, pb_), (pl_, pr_)))

    # Small NCHW input consistent with the module's forward (tiny-W shapes are
    # dispatched to XLA's fused pad; semantics identical).
    x_small = jax.random.normal(k1, (2, 4, 16, 16), dtype=jnp.float32)
    y_small = jax.block_until_ready(same_pad_2d(x_small, kernel_size=3, stride=1))
    assert y_small.shape == (2, 4, 18, 18), y_small.shape
    assert jnp.allclose(y_small, ref_pad(x_small, 3, 1)), "mismatch (small)"

    # Lane-dense input: exercises the Pallas kernel with an even 4-step
    # parallel grid (nc=16, c_blk=4).
    x_big = jax.random.normal(k2, (2, 8, 32, 256), dtype=jnp.float32)
    y_big = jax.block_until_ready(same_pad_2d(x_big, kernel_size=3, stride=1))
    assert y_big.shape == (2, 8, 34, 258), y_big.shape
    assert jnp.allclose(y_big, ref_pad(x_big, 3, 1)), "mismatch (big)"

    # Ragged channel tail (nc=5, c_blk=2 -> masked last block), stride 2.
    x_odd = jax.random.normal(k3, (1, 5, 24, 160), dtype=jnp.float32)
    y_odd = jax.block_until_ready(same_pad_2d(x_odd, kernel_size=3, stride=2))
    assert y_odd.shape == (1, 5, 25, 161), y_odd.shape
    assert jnp.allclose(y_odd, ref_pad(x_odd, 3, 2)), "mismatch (ragged)"

    # Zero-padding fast path (k=1, s=1 -> no padding, no kernel).
    y0 = same_pad_2d(x_small, kernel_size=1, stride=1)
    assert y0.shape == x_small.shape and jnp.allclose(y0, x_small)

    print("KERNEL_OK")
</pallas_src>

<mosaic_0001>
module attributes {stable_mosaic.version = 11 : i64} {
  func.func @kernel(%arg0: i32, %arg1: memref<4x32x256xf32, #tpu.memory_space<vmem>>, %arg2: memref<4x34x258xf32, #tpu.memory_space<vmem>>) attributes {dimension_semantics = [#tpu.dimension_semantics<parallel>], iteration_bounds = array<i64: 4>, scalar_prefetch = 0 : i64, scratch_operands = 0 : i64, tpu.core_type = #tpu.core_type<tc>, window_params = [{transform_indices = @transform_0, window_bounds = array<i64: 4, 32, 256>}, {transform_indices = @transform_1, window_bounds = array<i64: 4, 34, 258>}]} {
    %cst = arith.constant 0.000000e+00 : f32
    %0 = vector.broadcast %cst : f32 to vector<4x1x258xf32>
    %c0 = arith.constant 0 : index
    %c0_0 = arith.constant 0 : index
    %c0_1 = arith.constant 0 : index
    %1 = vector.load %arg2[%c0, %c0_0, %c0_1] : memref<4x34x258xf32, #tpu.memory_space<vmem>>, vector<4x1x258xf32>
    tpu.vector_store %arg2[%c0, %c0_0, %c0_1], %0 {strides = array<i32>} : memref<4x34x258xf32, #tpu.memory_space<vmem>>, vector<4x1x258xf32>,
    %cst_2 = arith.constant 0.000000e+00 : f32
    %2 = vector.broadcast %cst_2 : f32 to vector<4x1x258xf32>
    %c0_3 = arith.constant 0 : index
    %c33 = arith.constant 33 : index
    %c0_4 = arith.constant 0 : index
    %3 = vector.load %arg2[%c0_3, %c33, %c0_4] : memref<4x34x258xf32, #tpu.memory_space<vmem>>, vector<4x1x258xf32>
    tpu.vector_store %arg2[%c0_3, %c33, %c0_4], %2 {strides = array<i32>} : memref<4x34x258xf32, #tpu.memory_space<vmem>>, vector<4x1x258xf32>,
    %cst_5 = arith.constant 0.000000e+00 : f32
    %4 = vector.broadcast %cst_5 : f32 to vector<4x32x1xf32>
    %c0_6 = arith.constant 0 : index
    %c1 = arith.constant 1 : index
    %c0_7 = arith.constant 0 : index
    %5 = vector.load %arg2[%c0_6, %c1, %c0_7] : memref<4x34x258xf32, #tpu.memory_space<vmem>>, vector<4x32x1xf32>
    tpu.vector_store %arg2[%c0_6, %c1, %c0_7], %4 {strides = array<i32>} : memref<4x34x258xf32, #tpu.memory_space<vmem>>, vector<4x32x1xf32>,
    %cst_8 = arith.constant 0.000000e+00 : f32
    %6 = vector.broadcast %cst_8 : f32 to vector<4x32x1xf32>
    %c0_9 = arith.constant 0 : index
    %c1_10 = arith.constant 1 : index
    %c257 = arith.constant 257 : index
    %7 = vector.load %arg2[%c0_9, %c1_10, %c257] : memref<4x34x258xf32, #tpu.memory_space<vmem>>, vector<4x32x1xf32>
    tpu.vector_store %arg2[%c0_9, %c1_10, %c257], %6 {strides = array<i32>} : memref<4x34x258xf32, #tpu.memory_space<vmem>>, vector<4x32x1xf32>,
    %c0_11 = arith.constant 0 : index
    %c0_12 = arith.constant 0 : index
    %c0_13 = arith.constant 0 : index
    %8 = vector.load %arg1[%c0_11, %c0_12, %c0_13] : memref<4x32x256xf32, #tpu.memory_space<vmem>>, vector<4x32x256xf32>
    %c0_14 = arith.constant 0 : index
    %c1_15 = arith.constant 1 : index
    %c1_16 = arith.constant 1 : index
    %9 = vector.load %arg2[%c0_14, %c1_15, %c1_16] : memref<4x34x258xf32, #tpu.memory_space<vmem>>, vector<4x32x256xf32>
    tpu.vector_store %arg2[%c0_14, %c1_15, %c1_16], %8 {strides = array<i32>} : memref<4x34x258xf32, #tpu.memory_space<vmem>>, vector<4x32x256xf32>,
    return
  }
  func.func @transform_0(%arg0: i32) -> (i32, i32, i32) {
    %c0_i32 = arith.constant 0 : i32
    %c0_i32_0 = arith.constant 0 : i32
    %c0_i32_1 = arith.constant 0 : i32
    return %arg0, %c0_i32, %c0_i32_0 : i32, i32, i32
  }
  func.func @transform_1(%arg0: i32) -> (i32, i32, i32) {
    %c0_i32 = arith.constant 0 : i32
    %c0_i32_0 = arith.constant 0 : i32
    %c0_i32_1 = arith.constant 0 : i32
    return %arg0, %c0_i32, %c0_i32_0 : i32, i32, i32
  }
}

</mosaic_0001>

<llo_original>
// kernel: tpu_custom_call.1
$region0: #{tpu_custom_call.1}
  #allocation0 [shape = 'u32[]', space=smem, size = 0x4, offset = 0x4, fixed_abs, tag = 'smem constant byte address 0x4 - core index']
  #allocation1 [shape = 'u32[72,128]{1,0:T(1,128)}', space=vmem, size = 0x9000, scoped, tag = 'internal scratch']
  %s0 = inlined_call_operand.hbm [shape: f32[16,32,256], index: 0, kind: input, shape index: {}]
  %s1 = inlined_call_operand.vmem [shape: f32[16,34,258], index: 1, kind: output, shape index: {}]
  %s2 = sld [smem:[#allocation0]]
  $region41: #{tpu_custom_call.1} parent=0
    _
  %s4 = ssub.s32 1, %s2
  %s5 = scalar_select 0, %s4, %s2
  $region1: #{tpu_custom_call.1} parent=0
    #allocation2 [shape = 'u8[262144]{0}', space=vmem, size = 0x40000, scoped, tag = 'input window, operand 0']
    #allocation3 [shape = 's32[2]{0}', space=sflag, size = 0x8, scoped, tag = 'scoped memory for tpu_custom_call.1']
    %6 = vsyncpa [#allocation3], 0
    %s7 = scalar_lea.sflag [#allocation3], 1
    %8 = vsyncpa %s7, 0
    loop: start=0, step=1, limit=6
    $region2: #{tpu_custom_call.1} parent=1 // loop_pre_header
      _
    $region3: #{tpu_custom_call.1} parent=1 // loop_header
      %s10 = sphi 0, %s14
      %p11 = scmp.ge.s32.totalorder %s10, 6
      %s20 = sphi 0, %s22
      %s23 = sphi 0, %s20
      %s24 = sphi 0, %s23
      %s40 = sphi 0, %s24
      %s46 = sphi 0, %s48
      %s49 = sphi 0, %s46
      %s50 = sphi 0, %s49
      %s66 = sphi 0, %s50
    $region4: #{tpu_custom_call.1} parent=1 // loop_header_branch
      %13 = sbr.rel (%p11) target = $region8
    $region5: #{tpu_custom_call.1} parent=1 // loop_body
      %s15 = ssub.s32 %s10, 1
      %s16 = ssub.s32 %s10, 2
      %s17 = sadd.s32 %s10, 1
      %s18 = ssub.s32 %s10, %s17
      %p19 = scmp.eq.s32.totalorder %s18, 0
      %s21 = sadd.s32 %s20, 1
      %s22 = scalar_select %p19, %s20, %s21
      %p25 = pneg %p19
      %p26 = scmp.eq.s32.totalorder %s10, 3
      %p27 = por %p25, %p26
      %p28 = scmp.ne.s32.totalorder %s20, %s23
      %p29 = scmp.eq.s32.totalorder %s10, 0
      %p30 = por %p28, %p29
      %p31 = scmp.ne.s32.totalorder %s20, %s23
      %p32 = scmp.eq.s32.totalorder %s15, 3
      %p33 = por %p31, %p32
      %p34 = scmp.ne.s32.totalorder %s23, %s24
      %p35 = scmp.eq.s32.totalorder %s15, 0
      %p36 = por %p34, %p35
      %p37 = scmp.ne.s32.totalorder %s23, %s24
      %p38 = scmp.eq.s32.totalorder %s16, 3
      %p39 = por %p37, %p38
      %p41 = scmp.ne.s32.totalorder %s24, %s40
      %p42 = scmp.eq.s32.totalorder %s16, 0
      %p43 = por %p41, %p42
      %s44 = ssub.s32 %s10, %s17
      %p45 = scmp.eq.s32.totalorder %s44, 0
      %s47 = sadd.s32 %s46, 1
      %s48 = scalar_select %p45, %s46, %s47
      %p51 = pneg %p45
      %p52 = scmp.eq.s32.totalorder %s10, 3
      %p53 = por %p51, %p52
      %p54 = scmp.ne.s32.totalorder %s46, %s49
      %p55 = scmp.eq.s32.totalorder %s10, 0
      %p56 = por %p54, %p55
      %p57 = scmp.ne.s32.totalorder %s46, %s49
      %p58 = scmp.eq.s32.totalorder %s15, 3
      %p59 = por %p57, %p58
      %p60 = scmp.ne.s32.totalorder %s49, %s50
      %p61 = scmp.eq.s32.totalorder %s15, 0
      %p62 = por %p60, %p61
      %p63 = scmp.ne.s32.totalorder %s49, %s50
      %p64 = scmp.eq.s32.totalorder %s16, 3
      %p65 = por %p63, %p64
      %p67 = scmp.ne.s32.totalorder %s50, %s66
      %p68 = scmp.eq.s32.totalorder %s16, 0
      %p69 = por %p67, %p68
      %p70 = scmp.le.s32.totalorder 1, %s10
      %p71 = scmp.lt.s32.totalorder %s10, 5
      %p72 = pnand %p70, %p71
      %p73 = pneg %p72
      // Predicated region
      $region9: #{tpu_custom_call.1} parent=5 // pred_check
        _
      $region10: #{tpu_custom_call.1} parent=5 // pred_check_branch
        %75 = sbr.rel (%p72) target = $region12
      $region11: #{tpu_custom_call.1} parent=5 // pred_region
        %s76 = ssub.s32 %s10, 1
      $region12: #{tpu_custom_call.1} parent=5 // pred_fallthru
        _
      %p77 = scmp.lt.s32.totalorder %s10, 4
      // Predicated region
      $region13: #{tpu_custom_call.1} parent=5 // pred_check
        %p78 = pneg %p77
      $region14: #{tpu_custom_call.1} parent=5 // pred_check_branch
        %80 = sbr.rel (%p78) target = $region16
      $region15: #{tpu_custom_call.1} parent=5 // pred_region
        // Predicated region
        $region17: #{tpu_custom_call.1} parent=15 // pred_check
          %p81 = pneg %p30
        $region18: #{tpu_custom_call.1} parent=15 // pred_check_branch
          %83 = sbr.rel (%p81) target = $region20
        $region19: #{tpu_custom_call.1} parent=15 // pred_region
          %s84 = sand.u32 %s20, 1
          %s85 = scalar_lea.sflag [#allocation3], %s84
          %s86 = sand.u32 %s20, 1
          %s87 = smul.addr %s86, 256
          %s88 = scalar_lea.vmem [#allocation2], %s87
          %s89 = smul.u32 4, %s10
          %91 = vsyncadd %s85, 0
          %s92 = smul.addr %s89, 8
          %s93 = smul.addr %s92, 8
          %s94 = scalar_lea.hbm %s0, %s93
          %s95 = sshll.u32 %s94, 4
          %s96 = int_to_ptr.hbm [resolvable:$true] %s95
          %s97 = sshll.u32 %s88, 4
          %s98 = int_to_ptr.vmem [resolvable:$true] %s97
          %103 = dma.hbm_to_vmem [thread:$0]  %s96, 4096, %s98, %s85, 256, 256, 16
        $region20: #{tpu_custom_call.1} parent=15 // pred_fallthru
          _
      $region16: #{tpu_custom_call.1} parent=5 // pred_fallthru
        _
      %p104 = scmp.le.s32.totalorder 1, %s10
      %p105 = scmp.lt.s32.totalorder %s10, 5
      %p106 = pnand %p104, %p105
      %p107 = pneg %p106
      // Predicated region
      $region21: #{tpu_custom_call.1} parent=5 // pred_check
        _
      $region22: #{tpu_custom_call.1} parent=5 // pred_check_branch
        %109 = sbr.rel (%p106) target = $region24
      $region23: #{tpu_custom_call.1} parent=5 // pred_region
        %s110 = ssub.s32 %s10, 1
        %s111 = sand.u32 %s23, 1
        %s112 = scalar_lea.sflag [#allocation3], %s111
        %s113 = sand.u32 %s23, 1
        %s114 = smul.addr %s113, 256
        %s115 = scalar_lea.vmem [#allocation2], %s114
        // Predicated region
        $region25: #{tpu_custom_call.1} parent=23 // pred_check
          %p116 = pneg %p36
        $region26: #{tpu_custom_call.1} parent=23 // pred_check_branch
          %118 = sbr.rel (%p116) target = $region28
        $region27: #{tpu_custom_call.1} parent=23 // pred_region
          %120 = dma.done %s112, 4096
        $region28: #{tpu_custom_call.1} parent=23 // pred_fallthru
          _
        %s121 = sand.u32 %s23, 1
        %s122 = scalar_lea.sflag [#allocation3], %s121
        %s123 = sand.u32 %s23, 1
        %s124 = smul.addr %s123, 256
        %s125 = scalar_lea.vmem [#allocation2], %s124
        %p126 = pneg %p36
        %p127 = pneg %p33
        %p128 = pneg %p62
        %p129 = pneg %p59
        %s130 = smul.u32 4, %s15
        %p131 = scmp.lt.s32.totalorder %s130, 15
        %s132 = scalar_select %p131, %s130, 15
        %s133 = smul.addr %s132, 15
        %s134 = smul.addr %s133, 8
        %s135 = scalar_lea.vmem %s1, %s134
        %s136 = smul.u32 4, %s15
        %s137 = smul.u32 4, %s15
        %p138 = scmp.lt.s32.totalorder %s137, 15
        %s139 = scalar_select %p138, %s137, 15
        %s140 = smul.addr %s139, 15
        %s141 = smul.addr %s140, 8
        %s142 = scalar_lea.vmem %s1, %s141
        %s143 = smul.u32 4, %s15
        %v144 = vlaneseq
        %vm145 = vcmp.ge.s32.totalorder %v144, 0
        %vm146 = vcmp.lt.s32.totalorder %v144, 258
        %vm147 = vmand %vm145, %vm146
        %148 = vst.msk [vmem:[%s142] ss:$8 sm:$0x7] %vm147, 0.0
        %149 = vst.msk [vmem:[%s142] ss:$8 sm:$0x0] %vm147, 0.0
        %s150 = scalar_lea.vmem %s142, 120
        %151 = vst.msk [vmem:[%s150] ss:$8 sm:$0x7] %vm147, 0.0
        %152 = vst.msk [vmem:[%s150] ss:$8 sm:$0x0] %vm147, 0.0
        %s153 = scalar_lea.vmem %s142, 240
        %154 = vst.msk [vmem:[%s153] ss:$8 sm:$0x7] %vm147, 0.0
        %155 = vst.msk [vmem:[%s153] ss:$8 sm:$0x0] %vm147, 0.0
        %s156 = scalar_lea.vmem %s142, 360
        %157 = vst.msk [vmem:[%s156] ss:$8 sm:$0x7] %vm147, 0.0
        %158 = vst.msk [vmem:[%s156] ss:$8 sm:$0x0] %vm147, 0.0
        %s159 = scalar_lea.vmem %s142, 97
        %160 = vst.msk [vmem:[%s159] ss:$8 sm:$0x7] %vm147, 0.0
        %161 = vst.msk [vmem:[%s159] ss:$8 sm:$0x0] %vm147, 0.0
        %s162 = scalar_lea.vmem %s142, 217
        %163 = vst.msk [vmem:[%s162] ss:$8 sm:$0x7] %vm147, 0.0
        %164 = vst.msk [vmem:[%s162] ss:$8 sm:$0x0] %vm147, 0.0
        %s165 = scalar_lea.vmem %s142, 337
        %166 = vst.msk [vmem:[%s165] ss:$8 sm:$0x7] %vm147, 0.0
        %167 = vst.msk [vmem:[%s165] ss:$8 sm:$0x0] %vm147, 0.0
        %s168 = scalar_lea.vmem %s142, 457
        %169 = vst.msk [vmem:[%s168] ss:$8 sm:$0x7] %vm147, 0.0
        %170 = vst.msk [vmem:[%s168] ss:$8 sm:$0x0] %vm147, 0.0
        %vm171 = vcmask 7169
        %172 = vst.msk [vmem:[%s142] sm:$0xfe] %vm171, 0.0
        %vm173 = vcmask 7168
        %174 = vst.msk [vmem:[%s142 + $0x18] sm:$0xff] %vm173, 0.0
        %175 = vst.msk [vmem:[%s142 + $0x30] sm:$0xff] %vm173, 0.0
        %176 = vst.msk [vmem:[%s142 + $0x48] sm:$0xff] %vm173, 0.0
        %vm177 = vcmask 0
        %178 = vst.msk [vmem:[%s142 + $0x60] sm:$0x1] %vm177, 0.0
        %179 = vst.msk [vmem:[%s142 + $0x78] sm:$0xfe] %vm171, 0.0
        %180 = vst.msk [vmem:[%s142 + $0x90] sm:$0xff] %vm173, 0.0
        %181 = vst.msk [vmem:[%s142 + $0xa8] sm:$0xff] %vm173, 0.0
        %182 = vst.msk [vmem:[%s142 + $0xc0] sm:$0xff] %vm173, 0.0
        %183 = vst.msk [vmem:[%s142 + $0xd8] sm:$0x1] %vm177, 0.0
        %184 = vst.msk [vmem:[%s142 + $0xf0] sm:$0xfe] %vm171, 0.0
        %185 = vst.msk [vmem:[%s142 + $0x108] sm:$0xff] %vm173, 0.0
        %186 = vst.msk [vmem:[%s142 + $0x120] sm:$0xff] %vm173, 0.0
        %187 = vst.msk [vmem:[%s142 + $0x138] sm:$0xff] %vm173, 0.0
        %188 = vst.msk [vmem:[%s142 + $0x150] sm:$0x1] %vm177, 0.0
        %189 = vst.msk [vmem:[%s142 + $0x168] sm:$0xfe] %vm171, 0.0
        %190 = vst.msk [vmem:[%s142 + $0x180] sm:$0xff] %vm173, 0.0
        %191 = vst.msk [vmem:[%s142 + $0x198] sm:$0xff] %vm173, 0.0
        %192 = vst.msk [vmem:[%s142 + $0x1b0] sm:$0xff] %vm173, 0.0
        %193 = vst.msk [vmem:[%s142 + $0x1c8] sm:$0x1] %vm177, 0.0
        %vm194 = vcmask 15369
        %195 = vst.msk [vmem:[%s142 + $0x10] sm:$0xfe] %vm194, 0.0
        %vm196 = vcmask 15368
        %197 = vst.msk [vmem:[%s142 + $0x28] sm:$0xff] %vm196, 0.0
        %198 = vst.msk [vmem:[%s142 + $0x40] sm:$0xff] %vm196, 0.0
        %199 = vst.msk [vmem:[%s142 + $0x58] sm:$0xff] %vm196, 0.0
        %vm200 = vcmask 8200
        %201 = vst.msk [vmem:[%s142 + $0x70] sm:$0x1] %vm200, 0.0
        %202 = vst.msk [vmem:[%s142 + $0x88] sm:$0xfe] %vm194, 0.0
        %203 = vst.msk [vmem:[%s142 + $0xa0] sm:$0xff] %vm196, 0.0
        %204 = vst.msk [vmem:[%s142 + $0xb8] sm:$0xff] %vm196, 0.0
        %205 = vst.msk [vmem:[%s142 + $0xd0] sm:$0xff] %vm196, 0.0
        %206 = vst.msk [vmem:[%s142 + $0xe8] sm:$0x1] %vm200, 0.0
        %207 = vst.msk [vmem:[%s142 + $0x100] sm:$0xfe] %vm194, 0.0
        %208 = vst.msk [vmem:[%s142 + $0x118] sm:$0xff] %vm196, 0.0
        %209 = vst.msk [vmem:[%s142 + $0x130] sm:$0xff] %vm196, 0.0
        %210 = vst.msk [vmem:[%s142 + $0x148] sm:$0xff] %vm196, 0.0
        %211 = vst.msk [vmem:[%s142 + $0x160] sm:$0x1] %vm200, 0.0
        %212 = vst.msk [vmem:[%s142 + $0x178] sm:$0xfe] %vm194, 0.0
        %213 = vst.msk [vmem:[%s142 + $0x190] sm:$0xff] %vm196, 0.0
        %214 = vst.msk [vmem:[%s142 + $0x1a8] sm:$0xff] %vm196, 0.0
        %215 = vst.msk [vmem:[%s142 + $0x1c0] sm:$0xff] %vm196, 0.0
        %216 = vst.msk [vmem:[%s142 + $0x1d8] sm:$0x1] %vm200, 0.0
        %v217 = vld [vmem:[%s115] sm:$0xff]
        %v218 = vld [vmem:[%s115 + $0x8] sm:$0xff]
        %v219 = vld [vmem:[%s115 + $0x10] sm:$0xff]
        %v220 = vld [vmem:[%s115 + $0x18] sm:$0xff]
        %v221 = vld [vmem:[%s115 + $0x20] sm:$0xff]
        %v222 = vld [vmem:[%s115 + $0x28] sm:$0xff]
        %v223 = vld [vmem:[%s115 + $0x30] sm:$0xff]
        %v224 = vld [vmem:[%s115 + $0x38] sm:$0xff]
        %v225 = vld [vmem:[%s115 + $0x40] sm:$0xff]
        %v226 = vld [vmem:[%s115 + $0x48] sm:$0xff]
        %v227 = vld [vmem:[%s115 + $0x50] sm:$0xff]
        %v228 = vld [vmem:[%s115 + $0x58] sm:$0xff]
        %v229 = vld [vmem:[%s115 + $0x60] sm:$0xff]
        %v230 = vld [vmem:[%s115 + $0x68] sm:$0xff]
        %v231 = vld [vmem:[%s115 + $0x70] sm:$0xff]
        %v232 = vld [vmem:[%s115 + $0x78] sm:$0xff]
        %v233 = vld [vmem:[%s115 + $0x80] sm:$0xff]
        %v234 = vld [vmem:[%s115 + $0x88] sm:$0xff]
        %v235 = vld [vmem:[%s115 + $0x90] sm:$0xff]
        %v236 = vld [vmem:[%s115 + $0x98] sm:$0xff]
        %v237 = vld [vmem:[%s115 + $0xa0] sm:$0xff]
        %v238 = vld [vmem:[%s115 + $0xa8] sm:$0xff]
        %v239 = vld [vmem:[%s115 + $0xb0] sm:$0xff]
        %v240 = vld [vmem:[%s115 + $0xb8] sm:$0xff]
        %v241 = vld [vmem:[%s115 + $0xc0] sm:$0xff]
        %v242 = vld [vmem:[%s115 + $0xc8] sm:$0xff]
        %v243 = vld [vmem:[%s115 + $0xd0] sm:$0xff]
        %v244 = vld [vmem:[%s115 + $0xd8] sm:$0xff]
        %v245 = vld [vmem:[%s115 + $0xe0] sm:$0xff]
        %v246 = vld [vmem:[%s115 + $0xe8] sm:$0xff]
        %v247 = vld [vmem:[%s115 + $0xf0] sm:$0xff]
        %v248 = vld [vmem:[%s115 + $0xf8] sm:$0xff]
        %vm281 = vcmask 1040384
        %v282 = vrot.slane %v217, 7
        %v283 = vrot.slane %v218, 7
        %v284 = vrot.slane %v219, 7
        %v285 = vsel %vm281, %v282, %v284
        %v286 = vrot.slane %v220, 7
        %v287 = vsel %vm281, %v283, %v286
        %v288 = vrot.slane %v221, 7
        %v289 = vsel %vm281, %v284, %v288
        %v290 = vrot.slane %v222, 7
        %v291 = vsel %vm281, %v286, %v290
        %v292 = vrot.slane %v223, 7
        %v293 = vsel %vm281, %v288, %v292
        %v294 = vrot.slane %v224, 7
        %v295 = vsel %vm281, %v290, %v294
        %v296 = vrot.slane %v225, 7
        %v297 = vrot.slane %v226, 7
        %v298 = vrot.slane %v227, 7
        %v299 = vsel %vm281, %v296, %v298
        %v300 = vrot.slane %v228, 7
        %v301 = vsel %vm281, %v297, %v300
        %v302 = vrot.slane %v229, 7
        %v303 = vsel %vm281, %v298, %v302
        %v304 = vrot.slane %v230, 7
        %v305 = vsel %vm281, %v300, %v304
        %v306 = vrot.slane %v231, 7
        %v307 = vsel %vm281, %v302, %v306
        %v308 = vrot.slane %v232, 7
        %v309 = vsel %vm281, %v304, %v308
        %v310 = vrot.slane %v233, 7
        %v311 = vrot.slane %v234, 7
        %v312 = vrot.slane %v235, 7
        %v313 = vsel %vm281, %v310, %v312
        %v314 = vrot.slane %v236, 7
        %v315 = vsel %vm281, %v311, %v314
        %v316 = vrot.slane %v237, 7
        %v317 = vsel %vm281, %v312, %v316
        %v318 = vrot.slane %v238, 7
        %v319 = vsel %vm281, %v314, %v318
        %v320 = vrot.slane %v239, 7
        %v321 = vsel %vm281, %v316, %v320
        %v322 = vrot.slane %v240, 7
        %v323 = vsel %vm281, %v318, %v322
        %v324 = vrot.slane %v241, 7
        %v325 = vrot.slane %v242, 7
        %v326 = vrot.slane %v243, 7
        %v327 = vsel %vm281, %v324, %v326
        %v328 = vrot.slane %v244, 7
        %v329 = vsel %vm281, %v325, %v328
        %v330 = vrot.slane %v245, 7
        %v331 = vsel %vm281, %v326, %v330
        %v332 = vrot.slane %v246, 7
        %v333 = vsel %vm281, %v328, %v332
        %v334 = vrot.slane %v247, 7
        %v335 = vsel %vm281, %v330, %v334
        %v336 = vrot.slane %v248, 7
        %v337 = vsel %vm281, %v332, %v336
        %338 = vrot.lane.b32.xlu0 %v282, 1
        %v339 = vpop.permute.xlu0 %338
        %340 = vrot.lane.b32.xlu0 %v283, 1
        %v341 = vpop.permute.xlu0 %340
        %342 = vrot.lane.b32.xlu0 %v285, 1
        %v343 = vpop.permute.xlu0 %342
        %344 = vrot.lane.b32.xlu0 %v287, 1
        %v345 = vpop.permute.xlu0 %344
        %346 = vrot.lane.b32.xlu0 %v289, 1
        %v347 = vpop.permute.xlu0 %346
        %348 = vrot.lane.b32.xlu0 %v291, 1
        %v349 = vpop.permute.xlu0 %348
        %350 = vrot.lane.b32.xlu0 %v293, 1
        %v351 = vpop.permute.xlu0 %350
        %352 = vrot.lane.b32.xlu0 %v295, 1
        %v353 = vpop.permute.xlu0 %352
        %354 = vrot.lane.b32.xlu0 %v292, 1
        %v355 = vpop.permute.xlu0 %354
        %356 = vrot.lane.b32.xlu0 %v294, 1
        %v357 = vpop.permute.xlu0 %356
        %358 = vrot.lane.b32.xlu0 %v296, 1
        %v359 = vpop.permute.xlu0 %358
        %360 = vrot.lane.b32.xlu0 %v297, 1
        %v361 = vpop.permute.xlu0 %360
        %362 = vrot.lane.b32.xlu0 %v299, 1
        %v363 = vpop.permute.xlu0 %362
        %364 = vrot.lane.b32.xlu0 %v301, 1
        %v365 = vpop.permute.xlu0 %364
        %366 = vrot.lane.b32.xlu0 %v303, 1
        %v367 = vpop.permute.xlu0 %366
        %368 = vrot.lane.b32.xlu0 %v305, 1
        %v369 = vpop.permute.xlu0 %368
        %370 = vrot.lane.b32.xlu0 %v307, 1
        %v371 = vpop.permute.xlu0 %370
        %372 = vrot.lane.b32.xlu0 %v309, 1
        %v373 = vpop.permute.xlu0 %372
        %374 = vrot.lane.b32.xlu0 %v306, 1
        %v375 = vpop.permute.xlu0 %374
        %376 = vrot.lane.b32.xlu0 %v308, 1
        %v377 = vpop.permute.xlu0 %376
        %378 = vrot.lane.b32.xlu0 %v310, 1
        %v379 = vpop.permute.xlu0 %378
        %380 = vrot.lane.b32.xlu0 %v311, 1
        %v381 = vpop.permute.xlu0 %380
        %382 = vrot.lane.b32.xlu0 %v313, 1
        %v383 = vpop.permute.xlu0 %382
        %384 = vrot.lane.b32.xlu0 %v315, 1
        %v385 = vpop.permute.xlu0 %384
        %386 = vrot.lane.b32.xlu0 %v317, 1
        %v387 = vpop.permute.xlu0 %386
        %388 = vrot.lane.b32.xlu0 %v319, 1
        %v389 = vpop.permute.xlu0 %388
        %390 = vrot.lane.b32.xlu0 %v321, 1
        %v391 = vpop.permute.xlu0 %390
        %392 = vrot.lane.b32.xlu0 %v323, 1
        %v393 = vpop.permute.xlu0 %392
        %394 = vrot.lane.b32.xlu0 %v320, 1
        %v395 = vpop.permute.xlu0 %394
        %396 = vrot.lane.b32.xlu0 %v322, 1
        %v397 = vpop.permute.xlu0 %396
        %398 = vrot.lane.b32.xlu0 %v324, 1
        %v399 = vpop.permute.xlu0 %398
        %400 = vrot.lane.b32.xlu0 %v325, 1
        %v401 = vpop.permute.xlu0 %400
        %402 = vrot.lane.b32.xlu0 %v327, 1
        %v403 = vpop.permute.xlu0 %402
        %404 = vrot.lane.b32.xlu0 %v329, 1
        %v405 = vpop.permute.xlu0 %404
        %406 = vrot.lane.b32.xlu0 %v331, 1
        %v407 = vpop.permute.xlu0 %406
        %408 = vrot.lane.b32.xlu0 %v333, 1
        %v409 = vpop.permute.xlu0 %408
        %410 = vrot.lane.b32.xlu0 %v335, 1
        %v411 = vpop.permute.xlu0 %410
        %412 = vrot.lane.b32.xlu0 %v337, 1
        %v413 = vpop.permute.xlu0 %412
        %414 = vrot.lane.b32.xlu0 %v334, 1
        %v415 = vpop.permute.xlu0 %414
        %416 = vrot.lane.b32.xlu0 %v336, 1
        %v417 = vpop.permute.xlu0 %416
        %v418 = vsel %vm173, %v339, %v341
        %v419 = vsel %vm173, %v343, %v345
        %v420 = vsel %vm173, %v347, %v349
        %v421 = vsel %vm173, %v351, %v353
        %v422 = vsel %vm173, %v355, %v357
        %v423 = vsel %vm173, %v359, %v361
        %v424 = vsel %vm173, %v363, %v365
        %v425 = vsel %vm173, %v367, %v369
        %v426 = vsel %vm173, %v371, %v373
        %v427 = vsel %vm173, %v375, %v377
        %v428 = vsel %vm173, %v379, %v381
        %v429 = vsel %vm173, %v383, %v385
        %v430 = vsel %vm173, %v387, %v389
        %v431 = vsel %vm173, %v391, %v393
        %v432 = vsel %vm173, %v395, %v397
        %v433 = vsel %vm173, %v399, %v401
        %v434 = vsel %vm173, %v403, %v405
        %v435 = vsel %vm173, %v407, %v409
        %v436 = vsel %vm173, %v411, %v413
        %v437 = vsel %vm173, %v415, %v417
        %vm498 = vcmask 1047561
        %499 = vst.msk [vmem:[%s142] sm:$0xfe] %vm498, %v339
        %500 = vst [vmem:[%s142 + $0x8] sm:$0xfe] %v418
        %501 = vst.msk [vmem:[%s142 + $0x10] sm:$0xfe] %vm171, %v341
        %vm502 = vcmask 1047560
        %503 = vst.msk [vmem:[%s142 + $0x18] sm:$0xff] %vm502, %v343
        %504 = vst [vmem:[%s142 + $0x20] sm:$0xff] %v419
        %505 = vst.msk [vmem:[%s142 + $0x28] sm:$0xff] %vm173, %v345
        %506 = vst.msk [vmem:[%s142 + $0x30] sm:$0xff] %vm502, %v347
        %507 = vst [vmem:[%s142 + $0x38] sm:$0xff] %v420
        %508 = vst.msk [vmem:[%s142 + $0x40] sm:$0xff] %vm173, %v349
        %509 = vst.msk [vmem:[%s142 + $0x48] sm:$0xff] %vm502, %v351
        %510 = vst [vmem:[%s142 + $0x50] sm:$0xff] %v421
        %511 = vst.msk [vmem:[%s142 + $0x58] sm:$0xff] %vm173, %v353
        %vm512 = vcmask 1040392
        %513 = vst.msk [vmem:[%s142 + $0x60] sm:$0x1] %vm512, %v355
        %514 = vst [vmem:[%s142 + $0x68] sm:$0x1] %v422
        %515 = vst.msk [vmem:[%s142 + $0x70] sm:$0x1] %vm177, %v357
        %516 = vst.msk [vmem:[%s142 + $0x78] sm:$0xfe] %vm498, %v359
        %517 = vst [vmem:[%s142 + $0x80] sm:$0xfe] %v423
        %518 = vst.msk [vmem:[%s142 + $0x88] sm:$0xfe] %vm171, %v361
        %519 = vst.msk [vmem:[%s142 + $0x90] sm:$0xff] %vm502, %v363
        %520 = vst [vmem:[%s142 + $0x98] sm:$0xff] %v424
        %521 = vst.msk [vmem:[%s142 + $0xa0] sm:$0xff] %vm173, %v365
        %522 = vst.msk [vmem:[%s142 + $0xa8] sm:$0xff] %vm502, %v367
        %523 = vst [vmem:[%s142 + $0xb0] sm:$0xff] %v425
        %524 = vst.msk [vmem:[%s142 + $0xb8] sm:$0xff] %vm173, %v369
        %525 = vst.msk [vmem:[%s142 + $0xc0] sm:$0xff] %vm502, %v371
        %526 = vst [vmem:[%s142 + $0xc8] sm:$0xff] %v426
        %527 = vst.msk [vmem:[%s142 + $0xd0] sm:$0xff] %vm173, %v373
        %528 = vst.msk [vmem:[%s142 + $0xd8] sm:$0x1] %vm512, %v375
        %529 = vst [vmem:[%s142 + $0xe0] sm:$0x1] %v427
        %530 = vst.msk [vmem:[%s142 + $0xe8] sm:$0x1] %vm177, %v377
        %531 = vst.msk [vmem:[%s142 + $0xf0] sm:$0xfe] %vm498, %v379
        %532 = vst [vmem:[%s142 + $0xf8] sm:$0xfe] %v428
        %533 = vst.msk [vmem:[%s142 + $0x100] sm:$0xfe] %vm171, %v381
        %534 = vst.msk [vmem:[%s142 + $0x108] sm:$0xff] %vm502, %v383
        %535 = vst [vmem:[%s142 + $0x110] sm:$0xff] %v429
        %536 = vst.msk [vmem:[%s142 + $0x118] sm:$0xff] %vm173, %v385
        %537 = vst.msk [vmem:[%s142 + $0x120] sm:$0xff] %vm502, %v387
        %538 = vst [vmem:[%s142 + $0x128] sm:$0xff] %v430
        %539 = vst.msk [vmem:[%s142 + $0x130] sm:$0xff] %vm173, %v389
        %540 = vst.msk [vmem:[%s142 + $0x138] sm:$0xff] %vm502, %v391
        %541 = vst [vmem:[%s142 + $0x140] sm:$0xff] %v431
        %542 = vst.msk [vmem:[%s142 + $0x148] sm:$0xff] %vm173, %v393
        %543 = vst.msk [vmem:[%s142 + $0x150] sm:$0x1] %vm512, %v395
        %544 = vst [vmem:[%s142 + $0x158] sm:$0x1] %v432
        %545 = vst.msk [vmem:[%s142 + $0x160] sm:$0x1] %vm177, %v397
        %546 = vst.msk [vmem:[%s142 + $0x168] sm:$0xfe] %vm498, %v399
        %547 = vst [vmem:[%s142 + $0x170] sm:$0xfe] %v433
        %548 = vst.msk [vmem:[%s142 + $0x178] sm:$0xfe] %vm171, %v401
        %549 = vst.msk [vmem:[%s142 + $0x180] sm:$0xff] %vm502, %v403
        %550 = vst [vmem:[%s142 + $0x188] sm:$0xff] %v434
        %551 = vst.msk [vmem:[%s142 + $0x190] sm:$0xff] %vm173, %v405
        %552 = vst.msk [vmem:[%s142 + $0x198] sm:$0xff] %vm502, %v407
        %553 = vst [vmem:[%s142 + $0x1a0] sm:$0xff] %v435
        %554 = vst.msk [vmem:[%s142 + $0x1a8] sm:$0xff] %vm173, %v409
        %555 = vst.msk [vmem:[%s142 + $0x1b0] sm:$0xff] %vm502, %v411
        %556 = vst [vmem:[%s142 + $0x1b8] sm:$0xff] %v436
        %557 = vst.msk [vmem:[%s142 + $0x1c0] sm:$0xff] %vm173, %v413
        %558 = vst.msk [vmem:[%s142 + $0x1c8] sm:$0x1] %vm512, %v415
        %559 = vst [vmem:[%s142 + $0x1d0] sm:$0x1] %v437
        %560 = vst.msk [vmem:[%s142 + $0x1d8] sm:$0x1] %vm177, %v417
        %s561 = smul.u32 4, %s15
        %p562 = scmp.lt.s32.totalorder %s561, 15
        %s563 = scalar_select %p562, %s561, 15
        %s564 = smul.addr %s563, 15
        %s565 = smul.addr %s564, 8
        %s566 = scalar_lea.vmem %s1, %s565
        // Predicated region
        $region29: #{tpu_custom_call.1} parent=23 // pred_check
          %p567 = pneg %p59
        $region30: #{tpu_custom_call.1} parent=23 // pred_check_branch
          %569 = sbr.rel (%p567) target = $region32
        $region31: #{tpu_custom_call.1} parent=23 // pred_region
          %s570 = smul.u32 4, %s15
        $region32: #{tpu_custom_call.1} parent=23 // pred_fallthru
          _
      $region24: #{tpu_custom_call.1} parent=5 // pred_fallthru
        _
      %p571 = scmp.le.s32.totalorder 2, %s10
      // Predicated region
      $region33: #{tpu_custom_call.1} parent=5 // pred_check
        %p572 = pneg %p571
      $region34: #{tpu_custom_call.1} parent=5 // pred_check_branch
        %574 = sbr.rel (%p572) target = $region36
      $region35: #{tpu_custom_call.1} parent=5 // pred_region
        %s575 = ssub.s32 %s10, 2
        // Predicated region
        $region37: #{tpu_custom_call.1} parent=35 // pred_check
          %p576 = pneg %p65
        $region38: #{tpu_custom_call.1} parent=35 // pred_check_branch
          %578 = sbr.rel (%p576) target = $region40
        $region39: #{tpu_custom_call.1} parent=35 // pred_region
          %s579 = smul.u32 4, %s16
          %p580 = scmp.lt.s32.totalorder %s579, 15
          %s581 = scalar_select %p580, %s579, 15
          %s582 = smul.addr %s581, 15
          %s583 = smul.addr %s582, 8
          %s584 = scalar_lea.vmem %s1, %s583
        $region40: #{tpu_custom_call.1} parent=35 // pred_fallthru
          _
      $region36: #{tpu_custom_call.1} parent=5 // pred_fallthru
        _
    $region6: #{tpu_custom_call.1} parent=1 // loop_footer
      %s14 = sadd.s32 1, %s10
    $region7: #{tpu_custom_call.1} parent=1 // loop_footer_branch
      %9 = sbr.rel target = $region3
    $region8: #{tpu_custom_call.1} parent=1 // loop_exit
      _
    %585 = vsyncpa [#allocation3], 1
    %s586 = scalar_lea.sflag [#allocation3], 1
    %587 = vsyncpa %s586, 1

</llo_original>
